<compile_context>
chip_gen: v5e
topology: v5e:2x2
jax: 0.10.0
libtpu: 0.0.40
codegen_flags: <defaults>
</compile_context>

<pallas_src>
import jax
import jax.numpy as jnp
from jax.experimental import pallas as pl
from jax.experimental.pallas import tpu as pltpu

HIDDEN = 768
MID = 64
NUM_CLASSES = 3
OUT_PAD = 128          # lane-dense padded output width (multiple of 128)
LN_EPS = 1e-5          # torch.nn.LayerNorm default


def _round_up(n, m):
    return ((n + m - 1) // m) * m


def head_kernel(x_ref, w1_ref, p_ref, w2_ref, b2_ref, o_ref):
    # Dropout layers (d1, d2) are identity in eval mode.
    x = x_ref[...].astype(jnp.bfloat16)     # f32 stream -> bf16 at the MXU boundary
    w1 = w1_ref[...]                        # bf16 [768, 64]

    # l1: Linear(768 -> 64)  -- MXU, f32 accumulation.
    h = jnp.dot(x, w1, preferred_element_type=jnp.float32)

    p = p_ref[...]                          # f32 [3, 64]: b1 / gamma / beta
    h = h + p[0:1, :]

    # bn1: LayerNorm over last dim (64), two-pass variance, f32 math.
    mu = jnp.mean(h, axis=-1, keepdims=True)
    var = jnp.mean(jnp.square(h - mu), axis=-1, keepdims=True)
    h = (h - mu) * jax.lax.rsqrt(var + LN_EPS)
    h = h * p[1:2, :] + p[2:3, :]

    # Tanh (EUP), f32.
    h = jnp.tanh(h)

    # l2: Linear(64 -> 3), zero-padded to 128 output lanes; bf16 MXU inputs,
    # f32 accumulation, bias added in f32, lane-dense bf16 store.
    out = jnp.dot(h.astype(jnp.bfloat16), w2_ref[...],
                  preferred_element_type=jnp.float32) + b2_ref[...]
    o_ref[...] = out.astype(o_ref.dtype)


def roberta_classifier_head(x, w1, b1, gamma, beta, w2, b2, *, tb=1024):
    """x: [B, 768] pooled RoBERTa output (f32). Returns [B, 3] f32 logits.

    tb: batch tile (rounded to a multiple of 16). The grid is cdiv(B, tb); the
    ragged last block is handled by Pallas (OOB writes dropped), so no batch
    padding/copying of the dominant x array is ever materialized. When B is
    large enough the tile is capped so the grid has >= 2 steps (v7x megacore).
    """
    B, H = x.shape
    assert H == HIDDEN

    # Effective batch tile: multiple of 16 (bf16 sublane packing for the output),
    # capped so the grid keeps at least 2 steps when possible.
    tb = _round_up(max(tb, 16), 16)
    half = _round_up(pl.cdiv(B, 2), 16)
    tb_eff = max(16, min(tb, half))
    grid = (pl.cdiv(B, tb_eff),)

    # Small, one-time parameter prep (would be pre-baked in deployment).
    w1_bf = w1.astype(jnp.bfloat16)                                  # [768, 64]
    params3 = jnp.concatenate(
        [b1.reshape(1, MID), gamma.reshape(1, MID), beta.reshape(1, MID)],
        axis=0).astype(jnp.float32)                                  # [3, 64]
    w2p = jnp.zeros((MID, OUT_PAD), jnp.bfloat16).at[:, :NUM_CLASSES].set(
        w2.astype(jnp.bfloat16))                                     # [64, 128]
    b2p = jnp.zeros((1, OUT_PAD), jnp.float32).at[:, :NUM_CLASSES].set(
        b2.reshape(1, NUM_CLASSES).astype(jnp.float32))              # [1, 128]

    out = pl.pallas_call(
        head_kernel,
        out_shape=jax.ShapeDtypeStruct((B, OUT_PAD), jnp.bfloat16),
        grid_spec=pltpu.PrefetchScalarGridSpec(
            num_scalar_prefetch=0,
            grid=grid,
            in_specs=[
                pl.BlockSpec((tb_eff, HIDDEN), lambda i: (i, 0)),     # x tile (f32 stream)
                pl.BlockSpec((HIDDEN, MID), lambda i: (0, 0)),        # W1 (bf16, invariant)
                pl.BlockSpec((3, MID), lambda i: (0, 0)),             # b1/gamma/beta packed
                pl.BlockSpec((MID, OUT_PAD), lambda i: (0, 0)),       # W2 (bf16, padded)
                pl.BlockSpec((1, OUT_PAD), lambda i: (0, 0)),         # b2 (f32, padded)
            ],
            out_specs=pl.BlockSpec((tb_eff, OUT_PAD), lambda i: (i, 0)),  # lane-dense bf16
        ),
        compiler_params=pltpu.CompilerParams(
            dimension_semantics=("parallel",),   # batch axis shards across v7x TCs
            vmem_limit_bytes=32 * 1024 * 1024,   # explicit, safe on v5e/v6e/v7x
        ),
    )(x, w1_bf, params3, w2p, b2p)

    # Strip the lane padding of the 3-class output; cast the tiny result to f32.
    return out[:, :NUM_CLASSES].astype(jnp.float32)


def reference_head(x, w1, b1, gamma, beta, w2, b2, *, match_kernel_precision=False):
    """Pure-JAX reference. match_kernel_precision mirrors the kernel's bf16 steps."""
    if match_kernel_precision:
        h = jnp.dot(x.astype(jnp.bfloat16), w1.astype(jnp.bfloat16),
                    preferred_element_type=jnp.float32) + b1[0]
    else:
        h = jnp.dot(x.astype(jnp.float32), w1.astype(jnp.float32),
                    preferred_element_type=jnp.float32) + b1[0]
    mu = jnp.mean(h, axis=-1, keepdims=True)
    var = jnp.mean(jnp.square(h - mu), axis=-1, keepdims=True)
    h = (h - mu) / jnp.sqrt(var + LN_EPS)
    h = h * gamma[0] + beta[0]
    h = jnp.tanh(h)
    if match_kernel_precision:
        out = jnp.dot(h.astype(jnp.bfloat16), w2.astype(jnp.bfloat16),
                      preferred_element_type=jnp.float32) + b2[0]
        return out.astype(jnp.bfloat16).astype(jnp.float32)
    return h @ w2 + b2[0]


if __name__ == "__main__":
    key = jax.random.PRNGKey(0)
    kx, kw1, kb1, kw2, kb2 = jax.random.split(key, 5)

    # Small test shapes; B is deliberately NOT a multiple of the tile so the
    # ragged-tail (partial last block) path and a multi-step grid are exercised.
    B = 40

    x = jax.random.normal(kx, (B, HIDDEN), dtype=jnp.float32)               # pooled output
    w1 = jax.random.normal(kw1, (HIDDEN, MID), dtype=jnp.float32) * 0.02    # l1 weight [in, out]
    b1 = jax.random.normal(kb1, (1, MID), dtype=jnp.float32) * 0.02         # l1 bias
    gamma = jnp.ones((1, MID), dtype=jnp.float32)                           # LayerNorm weight
    beta = jnp.zeros((1, MID), dtype=jnp.float32)                           # LayerNorm bias
    w2 = jax.random.normal(kw2, (MID, NUM_CLASSES), dtype=jnp.float32) * 0.1   # l2 weight
    b2 = jax.random.normal(kb2, (1, NUM_CLASSES), dtype=jnp.float32) * 0.1     # l2 bias

    # Small explicit tile -> 3-step grid with a partial last block.
    out_small = roberta_classifier_head(x, w1, b1, gamma, beta, w2, b2, tb=16)
    out_small = jax.block_until_ready(out_small)
    # Default (large) tile -> grid capped to 2 steps (v7x megacore path).
    out_big = roberta_classifier_head(x, w1, b1, gamma, beta, w2, b2)
    out_big = jax.block_until_ready(out_big)

    for out in (out_small, out_big):
        assert out.shape == (B, NUM_CLASSES)
        assert bool(jnp.all(jnp.isfinite(out)))
        # Tight check against a reference that mirrors the kernel's precision...
        ref_match = reference_head(x, w1, b1, gamma, beta, w2, b2,
                                   match_kernel_precision=True)
        assert jnp.allclose(out, ref_match, atol=2e-3, rtol=2e-3)
        # ...and a loose check against the full-f32 reference (bf16 quantization).
        ref_f32 = reference_head(x, w1, b1, gamma, beta, w2, b2)
        assert jnp.allclose(out, ref_f32, atol=5e-2, rtol=5e-2)

    print("KERNEL_OK")
</pallas_src>

<mosaic_0001>
module attributes {stable_mosaic.version = 11 : i64} {
  func.func @head_kernel(%arg0: i32, %arg1: memref<16x768xf32, #tpu.memory_space<vmem>>, %arg2: memref<768x64xbf16, #tpu.memory_space<vmem>>, %arg3: memref<3x64xf32, #tpu.memory_space<vmem>>, %arg4: memref<64x128xbf16, #tpu.memory_space<vmem>>, %arg5: memref<1x128xf32, #tpu.memory_space<vmem>>, %arg6: memref<16x128xbf16, #tpu.memory_space<vmem>>) attributes {dimension_semantics = [#tpu.dimension_semantics<parallel>], iteration_bounds = array<i64: 3>, scalar_prefetch = 0 : i64, scratch_operands = 0 : i64, tpu.core_type = #tpu.core_type<tc>, window_params = [{transform_indices = @transform_0, window_bounds = array<i64: 16, 768>}, {pipeline_mode = #tpu.pipeline_mode<synchronous>, transform_indices = @transform_1, window_bounds = array<i64: 768, 64>}, {pipeline_mode = #tpu.pipeline_mode<synchronous>, transform_indices = @transform_2, window_bounds = array<i64: 3, 64>}, {pipeline_mode = #tpu.pipeline_mode<synchronous>, transform_indices = @transform_3, window_bounds = array<i64: 64, 128>}, {pipeline_mode = #tpu.pipeline_mode<synchronous>, transform_indices = @transform_4, window_bounds = array<i64: 1, 128>}, {transform_indices = @transform_5, window_bounds = array<i64: 16, 128>}]} {
    %c0 = arith.constant 0 : index
    %c0_0 = arith.constant 0 : index
    %0 = vector.load %arg1[%c0, %c0_0] : memref<16x768xf32, #tpu.memory_space<vmem>>, vector<16x768xf32>
    %1 = arith.truncf %0 : vector<16x768xf32> to vector<16x768xbf16>
    %c0_1 = arith.constant 0 : index
    %c0_2 = arith.constant 0 : index
    %2 = vector.load %arg2[%c0_1, %c0_2] : memref<768x64xbf16, #tpu.memory_space<vmem>>, vector<768x64xbf16>
    %cst = arith.constant dense<0.000000e+00> : vector<16x64xf32>
    %3 = tpu.matmul %1, %2, %cst {dimension_numbers = #tpu.dot_dimension_numbers<[1], [0], [0], [1], [0, 0, 1, 1], [], []>} : vector<16x768xbf16>, vector<768x64xbf16>, vector<16x64xf32> -> vector<16x64xf32>
    %c0_3 = arith.constant 0 : index
    %c0_4 = arith.constant 0 : index
    %4 = vector.load %arg3[%c0_3, %c0_4] : memref<3x64xf32, #tpu.memory_space<vmem>>, vector<3x64xf32>
    %5 = vector.extract_strided_slice %4 {offsets = [0, 0], sizes = [1, 64], strides = [1, 1]} : vector<3x64xf32> to vector<1x64xf32>
    %6 = vector.broadcast %5 : vector<1x64xf32> to vector<16x64xf32>
    %7 = arith.addf %3, %6 : vector<16x64xf32>
    %cst_5 = arith.constant dense<0.000000e+00> : vector<16xf32>
    %8 = vector.multi_reduction <add>, %7, %cst_5 [1] : vector<16x64xf32> to vector<16xf32>
    %9 = vector.shape_cast %8 : vector<16xf32> to vector<16x1xf32>
    %cst_6 = arith.constant 6.400000e+01 : f32
    %10 = vector.broadcast %cst_6 : f32 to vector<16x1xf32>
    %11 = arith.divf %9, %10 : vector<16x1xf32>
    %12 = vector.broadcast %11 : vector<16x1xf32> to vector<16x64xf32>
    %13 = arith.subf %7, %12 : vector<16x64xf32>
    %14 = arith.mulf %13, %13 : vector<16x64xf32>
    %cst_7 = arith.constant dense<0.000000e+00> : vector<16xf32>
    %15 = vector.multi_reduction <add>, %14, %cst_7 [1] : vector<16x64xf32> to vector<16xf32>
    %16 = vector.shape_cast %15 : vector<16xf32> to vector<16x1xf32>
    %cst_8 = arith.constant 6.400000e+01 : f32
    %17 = vector.broadcast %cst_8 : f32 to vector<16x1xf32>
    %18 = arith.divf %16, %17 : vector<16x1xf32>
    %19 = vector.broadcast %11 : vector<16x1xf32> to vector<16x64xf32>
    %20 = arith.subf %7, %19 : vector<16x64xf32>
    %cst_9 = arith.constant 9.99999974E-6 : f32
    %21 = vector.broadcast %cst_9 : f32 to vector<16x1xf32>
    %22 = arith.addf %18, %21 : vector<16x1xf32>
    %23 = math.rsqrt %22 : vector<16x1xf32>
    %24 = vector.broadcast %23 : vector<16x1xf32> to vector<16x64xf32>
    %25 = arith.mulf %20, %24 : vector<16x64xf32>
    %26 = vector.extract_strided_slice %4 {offsets = [1, 0], sizes = [1, 64], strides = [1, 1]} : vector<3x64xf32> to vector<1x64xf32>
    %27 = vector.broadcast %26 : vector<1x64xf32> to vector<16x64xf32>
    %28 = arith.mulf %25, %27 : vector<16x64xf32>
    %29 = vector.extract_strided_slice %4 {offsets = [2, 0], sizes = [1, 64], strides = [1, 1]} : vector<3x64xf32> to vector<1x64xf32>
    %30 = vector.broadcast %29 : vector<1x64xf32> to vector<16x64xf32>
    %31 = arith.addf %28, %30 : vector<16x64xf32>
    %32 = math.tanh %31 : vector<16x64xf32>
    %33 = arith.truncf %32 : vector<16x64xf32> to vector<16x64xbf16>
    %c0_10 = arith.constant 0 : index
    %c0_11 = arith.constant 0 : index
    %34 = vector.load %arg4[%c0_10, %c0_11] : memref<64x128xbf16, #tpu.memory_space<vmem>>, vector<64x128xbf16>
    %cst_12 = arith.constant dense<0.000000e+00> : vector<16x128xf32>
    %35 = tpu.matmul %33, %34, %cst_12 {dimension_numbers = #tpu.dot_dimension_numbers<[1], [0], [0], [1], [0, 0, 1, 1], [], []>} : vector<16x64xbf16>, vector<64x128xbf16>, vector<16x128xf32> -> vector<16x128xf32>
    %c0_13 = arith.constant 0 : index
    %c0_14 = arith.constant 0 : index
    %36 = vector.load %arg5[%c0_13, %c0_14] : memref<1x128xf32, #tpu.memory_space<vmem>>, vector<1x128xf32>
    %37 = vector.broadcast %36 : vector<1x128xf32> to vector<16x128xf32>
    %38 = arith.addf %35, %37 : vector<16x128xf32>
    %39 = arith.truncf %38 : vector<16x128xf32> to vector<16x128xbf16>
    %c0_15 = arith.constant 0 : index
    %c0_16 = arith.constant 0 : index
    %40 = vector.load %arg6[%c0_15, %c0_16] : memref<16x128xbf16, #tpu.memory_space<vmem>>, vector<16x128xbf16>
    tpu.vector_store %arg6[%c0_15, %c0_16], %39 {strides = array<i32>} : memref<16x128xbf16, #tpu.memory_space<vmem>>, vector<16x128xbf16>,
    return
  }
  func.func @transform_0(%arg0: i32) -> (i32, i32) {
    %c0_i32 = arith.constant 0 : i32
    %c0_i32_0 = arith.constant 0 : i32
    return %arg0, %c0_i32 : i32, i32
  }
  func.func @transform_1(%arg0: i32) -> (i32, i32) {
    %c0_i32 = arith.constant 0 : i32
    %c0_i32_0 = arith.constant 0 : i32
    %c0_i32_1 = arith.constant 0 : i32
    return %c0_i32, %c0_i32_0 : i32, i32
  }
  func.func @transform_2(%arg0: i32) -> (i32, i32) {
    %c0_i32 = arith.constant 0 : i32
    %c0_i32_0 = arith.constant 0 : i32
    %c0_i32_1 = arith.constant 0 : i32
    return %c0_i32, %c0_i32_0 : i32, i32
  }
  func.func @transform_3(%arg0: i32) -> (i32, i32) {
    %c0_i32 = arith.constant 0 : i32
    %c0_i32_0 = arith.constant 0 : i32
    %c0_i32_1 = arith.constant 0 : i32
    return %c0_i32, %c0_i32_0 : i32, i32
  }
  func.func @transform_4(%arg0: i32) -> (i32, i32) {
    %c0_i32 = arith.constant 0 : i32
    %c0_i32_0 = arith.constant 0 : i32
    %c0_i32_1 = arith.constant 0 : i32
    return %c0_i32, %c0_i32_0 : i32, i32
  }
  func.func @transform_5(%arg0: i32) -> (i32, i32) {
    %c0_i32 = arith.constant 0 : i32
    %c0_i32_0 = arith.constant 0 : i32
    return %arg0, %c0_i32 : i32, i32
  }
}

</mosaic_0001>

<llo_original>
// kernel: tpu_custom_call.1
$region0: #{tpu_custom_call.1}
  #allocation0 [shape = 'u32[]', space=smem, size = 0x4, offset = 0x4, fixed_abs, tag = 'smem constant byte address 0x4 - core index']
  #allocation1 [shape = 'u32[72,128]{1,0:T(1,128)}', space=vmem, size = 0x9000, scoped, tag = 'internal scratch']
  %s0 = inlined_call_operand.vmem [shape: f32[40,768], index: 0, kind: input, shape index: {}]
  %s1 = inlined_call_operand.vmem [shape: bf16[768,64], index: 1, kind: input, shape index: {}]
  %s2 = inlined_call_operand.vmem [shape: f32[3,64], index: 2, kind: input, shape index: {}]
  %s3 = inlined_call_operand.vmem [shape: bf16[64,128], index: 3, kind: input, shape index: {}]
  %s4 = inlined_call_operand.vmem [shape: f32[1,128], index: 4, kind: input, shape index: {}]
  %s5 = inlined_call_operand.hbm [shape: bf16[40,128], index: 5, kind: output, shape index: {}]
  %s6 = sld [smem:[#allocation0]]
  $region53: #{tpu_custom_call.1} parent=0
    _
  %s8 = ssub.s32 1, %s6
  %s9 = scalar_select 0, %s8, %s6
  $region1: #{tpu_custom_call.1} parent=0
    #allocation2 [shape = 'u8[8192]{0}', space=vmem, size = 0x2000, scoped, tag = 'output window, operand 0']
    #allocation3 [shape = 's32[2]{0}', space=sflag, size = 0x8, scoped, tag = 'scoped memory for tpu_custom_call.1']
    %10 = vsyncpa [#allocation3], 0
    %s11 = scalar_lea.sflag [#allocation3], 1
    %12 = vsyncpa %s11, 0
    loop: start=0, step=1, limit=5
    $region2: #{tpu_custom_call.1} parent=1 // loop_pre_header
      _
    $region3: #{tpu_custom_call.1} parent=1 // loop_header
      %s14 = sphi 0, %s18
      %p15 = scmp.ge.s32.totalorder %s14, 5
      %s24 = sphi 0, %s26
      %s27 = sphi 0, %s24
      %s28 = sphi 0, %s27
      %s44 = sphi 0, %s28
      %s48 = sphi 0, %s48
      %s50 = sphi 0, %s48
      %s51 = sphi 0, %s50
      %s65 = sphi 0, %s51
      %s69 = sphi 0, %s69
      %s71 = sphi 0, %s69
      %s72 = sphi 0, %s71
      %s86 = sphi 0, %s72
      %s90 = sphi 0, %s90
      %s92 = sphi 0, %s90
      %s93 = sphi 0, %s92
      %s107 = sphi 0, %s93
      %s111 = sphi 0, %s111
      %s113 = sphi 0, %s111
      %s114 = sphi 0, %s113
      %s128 = sphi 0, %s114
      %s134 = sphi 0, %s136
      %s137 = sphi 0, %s134
      %s138 = sphi 0, %s137
      %s154 = sphi 0, %s138
    $region4: #{tpu_custom_call.1} parent=1 // loop_header_branch
      %17 = sbr.rel (%p15) target = $region8
    $region5: #{tpu_custom_call.1} parent=1 // loop_body
      %s19 = ssub.s32 %s14, 1
      %s20 = ssub.s32 %s14, 2
      %s21 = sadd.s32 %s14, 1
      %s22 = ssub.s32 %s14, %s21
      %p23 = scmp.eq.s32.totalorder %s22, 0
      %s25 = sadd.s32 %s24, 1
      %s26 = scalar_select %p23, %s24, %s25
      %p29 = pneg %p23
      %p30 = scmp.eq.s32.totalorder %s14, 2
      %p31 = por %p29, %p30
      %p32 = scmp.ne.s32.totalorder %s24, %s27
      %p33 = scmp.eq.s32.totalorder %s14, 0
      %p34 = por %p32, %p33
      %p35 = scmp.ne.s32.totalorder %s24, %s27
      %p36 = scmp.eq.s32.totalorder %s19, 2
      %p37 = por %p35, %p36
      %p38 = scmp.ne.s32.totalorder %s27, %s28
      %p39 = scmp.eq.s32.totalorder %s19, 0
      %p40 = por %p38, %p39
      %p41 = scmp.ne.s32.totalorder %s27, %s28
      %p42 = scmp.eq.s32.totalorder %s20, 2
      %p43 = por %p41, %p42
      %p45 = scmp.ne.s32.totalorder %s28, %s44
      %p46 = scmp.eq.s32.totalorder %s20, 0
      %p47 = por %p45, %p46
      %s49 = sadd.s32 %s48, 1
      %p52 = scmp.eq.s32.totalorder %s14, 2
      %p53 = scmp.ne.s32.totalorder %s48, %s50
      %p54 = scmp.eq.s32.totalorder %s14, 0
      %p55 = por %p53, %p54
      %p56 = scmp.ne.s32.totalorder %s48, %s50
      %p57 = scmp.eq.s32.totalorder %s19, 2
      %p58 = por %p56, %p57
      %p59 = scmp.ne.s32.totalorder %s50, %s51
      %p60 = scmp.eq.s32.totalorder %s19, 0
      %p61 = por %p59, %p60
      %p62 = scmp.ne.s32.totalorder %s50, %s51
      %p63 = scmp.eq.s32.totalorder %s20, 2
      %p64 = por %p62, %p63
      %p66 = scmp.ne.s32.totalorder %s51, %s65
      %p67 = scmp.eq.s32.totalorder %s20, 0
      %p68 = por %p66, %p67
      %s70 = sadd.s32 %s69, 1
      %p73 = scmp.eq.s32.totalorder %s14, 2
      %p74 = scmp.ne.s32.totalorder %s69, %s71
      %p75 = scmp.eq.s32.totalorder %s14, 0
      %p76 = por %p74, %p75
      %p77 = scmp.ne.s32.totalorder %s69, %s71
      %p78 = scmp.eq.s32.totalorder %s19, 2
      %p79 = por %p77, %p78
      %p80 = scmp.ne.s32.totalorder %s71, %s72
      %p81 = scmp.eq.s32.totalorder %s19, 0
      %p82 = por %p80, %p81
      %p83 = scmp.ne.s32.totalorder %s71, %s72
      %p84 = scmp.eq.s32.totalorder %s20, 2
      %p85 = por %p83, %p84
      %p87 = scmp.ne.s32.totalorder %s72, %s86
      %p88 = scmp.eq.s32.totalorder %s20, 0
      %p89 = por %p87, %p88
      %s91 = sadd.s32 %s90, 1
      %p94 = scmp.eq.s32.totalorder %s14, 2
      %p95 = scmp.ne.s32.totalorder %s90, %s92
      %p96 = scmp.eq.s32.totalorder %s14, 0
      %p97 = por %p95, %p96
      %p98 = scmp.ne.s32.totalorder %s90, %s92
      %p99 = scmp.eq.s32.totalorder %s19, 2
      %p100 = por %p98, %p99
      %p101 = scmp.ne.s32.totalorder %s92, %s93
      %p102 = scmp.eq.s32.totalorder %s19, 0
      %p103 = por %p101, %p102
      %p104 = scmp.ne.s32.totalorder %s92, %s93
      %p105 = scmp.eq.s32.totalorder %s20, 2
      %p106 = por %p104, %p105
      %p108 = scmp.ne.s32.totalorder %s93, %s107
      %p109 = scmp.eq.s32.totalorder %s20, 0
      %p110 = por %p108, %p109
      %s112 = sadd.s32 %s111, 1
      %p115 = scmp.eq.s32.totalorder %s14, 2
      %p116 = scmp.ne.s32.totalorder %s111, %s113
      %p117 = scmp.eq.s32.totalorder %s14, 0
      %p118 = por %p116, %p117
      %p119 = scmp.ne.s32.totalorder %s111, %s113
      %p120 = scmp.eq.s32.totalorder %s19, 2
      %p121 = por %p119, %p120
      %p122 = scmp.ne.s32.totalorder %s113, %s114
      %p123 = scmp.eq.s32.totalorder %s19, 0
      %p124 = por %p122, %p123
      %p125 = scmp.ne.s32.totalorder %s113, %s114
      %p126 = scmp.eq.s32.totalorder %s20, 2
      %p127 = por %p125, %p126
      %p129 = scmp.ne.s32.totalorder %s114, %s128
      %p130 = scmp.eq.s32.totalorder %s20, 0
      %p131 = por %p129, %p130
      %s132 = ssub.s32 %s14, %s21
      %p133 = scmp.eq.s32.totalorder %s132, 0
      %s135 = sadd.s32 %s134, 1
      %s136 = scalar_select %p133, %s134, %s135
      %p139 = pneg %p133
      %p140 = scmp.eq.s32.totalorder %s14, 2
      %p141 = por %p139, %p140
      %p142 = scmp.ne.s32.totalorder %s134, %s137
      %p143 = scmp.eq.s32.totalorder %s14, 0
      %p144 = por %p142, %p143
      %p145 = scmp.ne.s32.totalorder %s134, %s137
      %p146 = scmp.eq.s32.totalorder %s19, 2
      %p147 = por %p145, %p146
      %p148 = scmp.ne.s32.totalorder %s137, %s138
      %p149 = scmp.eq.s32.totalorder %s19, 0
      %p150 = por %p148, %p149
      %p151 = scmp.ne.s32.totalorder %s137, %s138
      %p152 = scmp.eq.s32.totalorder %s20, 2
      %p153 = por %p151, %p152
      %p155 = scmp.ne.s32.totalorder %s138, %s154
      %p156 = scmp.eq.s32.totalorder %s20, 0
      %p157 = por %p155, %p156
      %p158 = scmp.le.s32.totalorder 1, %s14
      %p159 = scmp.lt.s32.totalorder %s14, 4
      %p160 = pnand %p158, %p159
      %p161 = pneg %p160
      // Predicated region
      $region9: #{tpu_custom_call.1} parent=5 // pred_check
        _
      $region10: #{tpu_custom_call.1} parent=5 // pred_check_branch
        %163 = sbr.rel (%p160) target = $region12
      $region11: #{tpu_custom_call.1} parent=5 // pred_region
        %s164 = ssub.s32 %s14, 1
        // Predicated region
        $region13: #{tpu_custom_call.1} parent=11 // pred_check
          %p165 = pneg %p61
        $region14: #{tpu_custom_call.1} parent=11 // pred_check_branch
          %167 = sbr.rel (%p165) target = $region16
        $region15: #{tpu_custom_call.1} parent=11 // pred_region
          _
        $region16: #{tpu_custom_call.1} parent=11 // pred_fallthru
          _
        // Predicated region
        $region17: #{tpu_custom_call.1} parent=11 // pred_check
          %p168 = pneg %p82
        $region18: #{tpu_custom_call.1} parent=11 // pred_check_branch
          %170 = sbr.rel (%p168) target = $region20
        $region19: #{tpu_custom_call.1} parent=11 // pred_region
          _
        $region20: #{tpu_custom_call.1} parent=11 // pred_fallthru
          _
        // Predicated region
        $region21: #{tpu_custom_call.1} parent=11 // pred_check
          %p171 = pneg %p103
        $region22: #{tpu_custom_call.1} parent=11 // pred_check_branch
          %173 = sbr.rel (%p171) target = $region24
        $region23: #{tpu_custom_call.1} parent=11 // pred_region
          _
        $region24: #{tpu_custom_call.1} parent=11 // pred_fallthru
          _
        // Predicated region
        $region25: #{tpu_custom_call.1} parent=11 // pred_check
          %p174 = pneg %p124
        $region26: #{tpu_custom_call.1} parent=11 // pred_check_branch
          %176 = sbr.rel (%p174) target = $region28
        $region27: #{tpu_custom_call.1} parent=11 // pred_region
          _
        $region28: #{tpu_custom_call.1} parent=11 // pred_fallthru
          _
      $region12: #{tpu_custom_call.1} parent=5 // pred_fallthru
        _
      %p177 = scmp.lt.s32.totalorder %s14, 3
      // Predicated region
      $region29: #{tpu_custom_call.1} parent=5 // pred_check
        %p178 = pneg %p177
      $region30: #{tpu_custom_call.1} parent=5 // pred_check_branch
        %180 = sbr.rel (%p178) target = $region32
      $region31: #{tpu_custom_call.1} parent=5 // pred_region
        // Predicated region
        $region33: #{tpu_custom_call.1} parent=31 // pred_check
          %p181 = pneg %p34
        $region34: #{tpu_custom_call.1} parent=31 // pred_check_branch
          %183 = sbr.rel (%p181) target = $region36
        $region35: #{tpu_custom_call.1} parent=31 // pred_region
          %s184 = smul.u32 2, %s14
          %s185 = ssub.s32 5, %s184
          %p186 = scmp.lt.s32.totalorder %s185, 2
          %s187 = scalar_select %p186, %s185, 2
          %s188 = smul.u32 8, %s187
          %s189 = smul.u32 %s188, 6
          %p190 = scmp.lt.s32.totalorder %s184, 4
          %s191 = scalar_select %p190, %s184, 4
          %s192 = smul.addr %s191, 6
          %s193 = smul.addr %s192, 8
          %s194 = scalar_lea.vmem %s0, %s193
          %s195 = smul.u32 2, %s14
          %s196 = ssub.s32 5, %s195
          %p197 = scmp.lt.s32.totalorder %s196, 2
          %s198 = scalar_select %p197, %s196, 2
          %s199 = smul.u32 8, %s198
          %s200 = smul.u32 %s199, 6
        $region36: #{tpu_custom_call.1} parent=31 // pred_fallthru
          _
      $region32: #{tpu_custom_call.1} parent=5 // pred_fallthru
        _
      %p201 = scmp.le.s32.totalorder 1, %s14
      %p202 = scmp.lt.s32.totalorder %s14, 4
      %p203 = pnand %p201, %p202
      %p204 = pneg %p203
      // Predicated region
      $region37: #{tpu_custom_call.1} parent=5 // pred_check
        _
      $region38: #{tpu_custom_call.1} parent=5 // pred_check_branch
        %206 = sbr.rel (%p203) target = $region40
      $region39: #{tpu_custom_call.1} parent=5 // pred_region
        %s207 = ssub.s32 %s14, 1
        %s208 = smul.u32 2, %s19
        %s209 = ssub.s32 5, %s208
        %p210 = scmp.lt.s32.totalorder %s209, 2
        %s211 = scalar_select %p210, %s209, 2
        %s212 = smul.u32 8, %s211
        %s213 = smul.u32 %s212, 6
        %p214 = scmp.lt.s32.totalorder %s208, 4
        %s215 = scalar_select %p214, %s208, 4
        %s216 = smul.addr %s215, 6
        %s217 = smul.addr %s216, 8
        %s218 = scalar_lea.vmem %s0, %s217
        %p219 = pneg %p40
        %p220 = pneg %p37
        %p221 = pneg %p61
        %p222 = pneg %p58
        %p223 = pneg %p82
        %p224 = pneg %p79
        %p225 = pneg %p103
        %p226 = pneg %p100
        %p227 = pneg %p124
        %p228 = pneg %p121
        %p229 = pneg %p150
        %p230 = pneg %p147
        %s231 = sand.u32 %s137, 1
        %s232 = scalar_lea.sflag [#allocation3], %s231
        %s233 = sand.u32 %s137, 1
        %s234 = smul.addr %s233, 8
        %s235 = scalar_lea.vmem [#allocation2], %s234
        %s236 = smul.u32 2, %s19
        %s237 = ssub.s32 5, %s236
        %p238 = scmp.lt.s32.totalorder %s237, 2
        %s239 = scalar_select %p238, %s237, 2
        %s240 = smul.u32 8, %s239
        %s241 = smul.u32 %s240, 6
        %p242 = scmp.lt.s32.totalorder %s236, 4
        %s243 = scalar_select %p242, %s236, 4
        %s244 = smul.addr %s243, 6
        %s245 = smul.addr %s244, 8
        %s246 = scalar_lea.vmem %s0, %s245
        %s247 = smul.u32 2, %s19
        %s248 = ssub.s32 5, %s247
        %p249 = scmp.lt.s32.totalorder %s248, 2
        %s250 = scalar_select %p249, %s248, 2
        %s251 = smul.u32 8, %s250
        %s252 = smul.u32 %s251, 6
        %s253 = smul.u32 2, %s19
        %s254 = ssub.s32 5, %s253
        %p255 = scmp.lt.s32.totalorder %s254, 2
        %s256 = scalar_select %p255, %s254, 2
        %s257 = smul.u32 4, %s256
        %v259 = vld [vmem:[%s246] sm:$0xff]
        %v260 = vld [vmem:[%s246 + $0x8] sm:$0xff]
        %v261 = vld [vmem:[%s246 + $0x10] sm:$0xff]
        %v262 = vld [vmem:[%s246 + $0x18] sm:$0xff]
        %v263 = vld [vmem:[%s246 + $0x20] sm:$0xff]
        %v264 = vld [vmem:[%s246 + $0x28] sm:$0xff]
        %v265 = vld [vmem:[%s246 + $0x30] sm:$0xff]
        %v266 = vld [vmem:[%s246 + $0x38] sm:$0xff]
        %v267 = vld [vmem:[%s246 + $0x40] sm:$0xff]
        %v268 = vld [vmem:[%s246 + $0x48] sm:$0xff]
        %v269 = vld [vmem:[%s246 + $0x50] sm:$0xff]
        %v270 = vld [vmem:[%s246 + $0x58] sm:$0xff]
        %v271 = vpack.c.bf16 %v265, %v259
        %v272 = vpack.c.bf16 %v266, %v260
        %v273 = vpack.c.bf16 %v267, %v261
        %v274 = vpack.c.bf16 %v268, %v262
        %v275 = vpack.c.bf16 %v269, %v263
        %v276 = vpack.c.bf16 %v270, %v264
        %v277 = vld [vmem:[%s1] sm:$0xf]
        %v278 = vld [vmem:[%s1 + $0x4] sm:$0xf]
        %v279 = vld [vmem:[%s1 + $0x8] sm:$0xf]
        %v280 = vld [vmem:[%s1 + $0xc] sm:$0xf]
        %v281 = vld [vmem:[%s1 + $0x10] sm:$0xf]
        %v282 = vld [vmem:[%s1 + $0x14] sm:$0xf]
        %v283 = vld [vmem:[%s1 + $0x18] sm:$0xf]
        %v284 = vld [vmem:[%s1 + $0x1c] sm:$0xf]
        %v285 = vld [vmem:[%s1 + $0x20] sm:$0xf]
        %v286 = vld [vmem:[%s1 + $0x24] sm:$0xf]
        %v287 = vld [vmem:[%s1 + $0x28] sm:$0xf]
        %v288 = vld [vmem:[%s1 + $0x2c] sm:$0xf]
        %v289 = vld [vmem:[%s1 + $0x30] sm:$0xf]
        %v290 = vld [vmem:[%s1 + $0x34] sm:$0xf]
        %v291 = vld [vmem:[%s1 + $0x38] sm:$0xf]
        %v292 = vld [vmem:[%s1 + $0x3c] sm:$0xf]
        %v293 = vld [vmem:[%s1 + $0x40] sm:$0xf]
        %v294 = vld [vmem:[%s1 + $0x44] sm:$0xf]
        %v295 = vld [vmem:[%s1 + $0x48] sm:$0xf]
        %v296 = vld [vmem:[%s1 + $0x4c] sm:$0xf]
        %v297 = vld [vmem:[%s1 + $0x50] sm:$0xf]
        %v298 = vld [vmem:[%s1 + $0x54] sm:$0xf]
        %v299 = vld [vmem:[%s1 + $0x58] sm:$0xf]
        %v300 = vld [vmem:[%s1 + $0x5c] sm:$0xf]
        %v301 = vld [vmem:[%s1 + $0x60] sm:$0xf]
        %v302 = vld [vmem:[%s1 + $0x64] sm:$0xf]
        %v303 = vld [vmem:[%s1 + $0x68] sm:$0xf]
        %v304 = vld [vmem:[%s1 + $0x6c] sm:$0xf]
        %v305 = vld [vmem:[%s1 + $0x70] sm:$0xf]
        %v306 = vld [vmem:[%s1 + $0x74] sm:$0xf]
        %v307 = vld [vmem:[%s1 + $0x78] sm:$0xf]
        %v308 = vld [vmem:[%s1 + $0x7c] sm:$0xf]
        %v309 = vld [vmem:[%s1 + $0x80] sm:$0xf]
        %v310 = vld [vmem:[%s1 + $0x84] sm:$0xf]
        %v311 = vld [vmem:[%s1 + $0x88] sm:$0xf]
        %v312 = vld [vmem:[%s1 + $0x8c] sm:$0xf]
        %v313 = vld [vmem:[%s1 + $0x90] sm:$0xf]
        %v314 = vld [vmem:[%s1 + $0x94] sm:$0xf]
        %v315 = vld [vmem:[%s1 + $0x98] sm:$0xf]
        %v316 = vld [vmem:[%s1 + $0x9c] sm:$0xf]
        %v317 = vld [vmem:[%s1 + $0xa0] sm:$0xf]
        %v318 = vld [vmem:[%s1 + $0xa4] sm:$0xf]
        %v319 = vld [vmem:[%s1 + $0xa8] sm:$0xf]
        %v320 = vld [vmem:[%s1 + $0xac] sm:$0xf]
        %v321 = vld [vmem:[%s1 + $0xb0] sm:$0xf]
        %v322 = vld [vmem:[%s1 + $0xb4] sm:$0xf]
        %v323 = vld [vmem:[%s1 + $0xb8] sm:$0xf]
        %v324 = vld [vmem:[%s1 + $0xbc] sm:$0xf]
        %v325 = vld [vmem:[%s1 + $0xc0] sm:$0xf]
        %v326 = vld [vmem:[%s1 + $0xc4] sm:$0xf]
        %v327 = vld [vmem:[%s1 + $0xc8] sm:$0xf]
        %v328 = vld [vmem:[%s1 + $0xcc] sm:$0xf]
        %v329 = vld [vmem:[%s1 + $0xd0] sm:$0xf]
        %v330 = vld [vmem:[%s1 + $0xd4] sm:$0xf]
        %v331 = vld [vmem:[%s1 + $0xd8] sm:$0xf]
        %v332 = vld [vmem:[%s1 + $0xdc] sm:$0xf]
        %v333 = vld [vmem:[%s1 + $0xe0] sm:$0xf]
        %v334 = vld [vmem:[%s1 + $0xe4] sm:$0xf]
        %v335 = vld [vmem:[%s1 + $0xe8] sm:$0xf]
        %v336 = vld [vmem:[%s1 + $0xec] sm:$0xf]
        %v337 = vld [vmem:[%s1 + $0xf0] sm:$0xf]
        %v338 = vld [vmem:[%s1 + $0xf4] sm:$0xf]
        %v339 = vld [vmem:[%s1 + $0xf8] sm:$0xf]
        %v340 = vld [vmem:[%s1 + $0xfc] sm:$0xf]
        %v341 = vld [vmem:[%s1 + $0x100] sm:$0xf]
        %v342 = vld [vmem:[%s1 + $0x104] sm:$0xf]
        %v343 = vld [vmem:[%s1 + $0x108] sm:$0xf]
        %v344 = vld [vmem:[%s1 + $0x10c] sm:$0xf]
        %v345 = vld [vmem:[%s1 + $0x110] sm:$0xf]
        %v346 = vld [vmem:[%s1 + $0x114] sm:$0xf]
        %v347 = vld [vmem:[%s1 + $0x118] sm:$0xf]
        %v348 = vld [vmem:[%s1 + $0x11c] sm:$0xf]
        %v349 = vld [vmem:[%s1 + $0x120] sm:$0xf]
        %v350 = vld [vmem:[%s1 + $0x124] sm:$0xf]
        %v351 = vld [vmem:[%s1 + $0x128] sm:$0xf]
        %v352 = vld [vmem:[%s1 + $0x12c] sm:$0xf]
        %v353 = vld [vmem:[%s1 + $0x130] sm:$0xf]
        %v354 = vld [vmem:[%s1 + $0x134] sm:$0xf]
        %v355 = vld [vmem:[%s1 + $0x138] sm:$0xf]
        %v356 = vld [vmem:[%s1 + $0x13c] sm:$0xf]
        %v357 = vld [vmem:[%s1 + $0x140] sm:$0xf]
        %v358 = vld [vmem:[%s1 + $0x144] sm:$0xf]
        %v359 = vld [vmem:[%s1 + $0x148] sm:$0xf]
        %v360 = vld [vmem:[%s1 + $0x14c] sm:$0xf]
        %v361 = vld [vmem:[%s1 + $0x150] sm:$0xf]
        %v362 = vld [vmem:[%s1 + $0x154] sm:$0xf]
        %v363 = vld [vmem:[%s1 + $0x158] sm:$0xf]
        %v364 = vld [vmem:[%s1 + $0x15c] sm:$0xf]
        %v365 = vld [vmem:[%s1 + $0x160] sm:$0xf]
        %v366 = vld [vmem:[%s1 + $0x164] sm:$0xf]
        %v367 = vld [vmem:[%s1 + $0x168] sm:$0xf]
        %v368 = vld [vmem:[%s1 + $0x16c] sm:$0xf]
        %v369 = vld [vmem:[%s1 + $0x170] sm:$0xf]
        %v370 = vld [vmem:[%s1 + $0x174] sm:$0xf]
        %v371 = vld [vmem:[%s1 + $0x178] sm:$0xf]
        %v372 = vld [vmem:[%s1 + $0x17c] sm:$0xf]
        %v373 = vld [vmem:[%s2] sm:$0x7]
        %v374 = vperm.slane %v373, 0
        %v471 = vunpack.c.l.b16 %v277
        %v472 = vunpack.c.l.b16 %v278
        %v473 = vunpack.c.l.b16 %v279
        %v474 = vunpack.c.l.b16 %v280
        %v475 = vunpack.c.l.b16 %v281
        %v476 = vunpack.c.l.b16 %v282
        %v477 = vunpack.c.l.b16 %v283
        %v478 = vunpack.c.l.b16 %v284
        %v479 = vunpack.c.l.b16 %v285
        %v480 = vunpack.c.l.b16 %v286
        %v481 = vunpack.c.l.b16 %v287
        %v482 = vunpack.c.l.b16 %v288
        %v483 = vunpack.c.l.b16 %v289
        %v484 = vunpack.c.l.b16 %v290
        %v485 = vunpack.c.l.b16 %v291
        %v486 = vunpack.c.l.b16 %v292
        %v487 = vunpack.c.l.b16 %v293
        %v488 = vunpack.c.l.b16 %v294
        %v489 = vunpack.c.l.b16 %v295
        %v490 = vunpack.c.l.b16 %v296
        %v491 = vunpack.c.l.b16 %v297
        %v492 = vunpack.c.l.b16 %v298
        %v493 = vunpack.c.l.b16 %v299
        %v494 = vunpack.c.l.b16 %v300
        %v495 = vunpack.c.l.b16 %v301
        %v496 = vunpack.c.l.b16 %v302
        %v497 = vunpack.c.l.b16 %v303
        %v498 = vunpack.c.l.b16 %v304
        %v499 = vunpack.c.l.b16 %v305
        %v500 = vunpack.c.l.b16 %v306
        %v501 = vunpack.c.l.b16 %v307
        %v502 = vunpack.c.l.b16 %v308
        %v503 = vunpack.c.l.b16 %v309
        %v504 = vunpack.c.l.b16 %v310
        %v505 = vunpack.c.l.b16 %v311
        %v506 = vunpack.c.l.b16 %v312
        %v507 = vunpack.c.l.b16 %v313
        %v508 = vunpack.c.l.b16 %v314
        %v509 = vunpack.c.l.b16 %v315
        %v510 = vunpack.c.l.b16 %v316
        %v511 = vunpack.c.l.b16 %v317
        %v512 = vunpack.c.l.b16 %v318
        %v513 = vunpack.c.l.b16 %v319
        %v514 = vunpack.c.l.b16 %v320
        %v515 = vunpack.c.l.b16 %v321
        %v516 = vunpack.c.l.b16 %v322
        %v517 = vunpack.c.l.b16 %v323
        %v518 = vunpack.c.l.b16 %v324
        %v519 = vunpack.c.l.b16 %v325
        %v520 = vunpack.c.l.b16 %v326
        %v521 = vunpack.c.l.b16 %v327
        %v522 = vunpack.c.l.b16 %v328
        %v523 = vunpack.c.l.b16 %v329
        %v524 = vunpack.c.l.b16 %v330
        %v525 = vunpack.c.l.b16 %v331
        %v526 = vunpack.c.l.b16 %v332
        %v527 = vunpack.c.l.b16 %v333
        %v528 = vunpack.c.l.b16 %v334
        %v529 = vunpack.c.l.b16 %v335
        %v530 = vunpack.c.l.b16 %v336
        %v531 = vunpack.c.l.b16 %v337
        %v532 = vunpack.c.l.b16 %v338
        %v533 = vunpack.c.l.b16 %v339
        %v534 = vunpack.c.l.b16 %v340
        %v535 = vunpack.c.l.b16 %v341
        %v536 = vunpack.c.l.b16 %v342
        %v537 = vunpack.c.l.b16 %v343
        %v538 = vunpack.c.l.b16 %v344
        %v539 = vunpack.c.l.b16 %v345
        %v540 = vunpack.c.l.b16 %v346
        %v541 = vunpack.c.l.b16 %v347
        %v542 = vunpack.c.l.b16 %v348
        %v543 = vunpack.c.l.b16 %v349
        %v544 = vunpack.c.l.b16 %v350
        %v545 = vunpack.c.l.b16 %v351
        %v546 = vunpack.c.l.b16 %v352
        %v547 = vunpack.c.l.b16 %v353
        %v548 = vunpack.c.l.b16 %v354
        %v549 = vunpack.c.l.b16 %v355
        %v550 = vunpack.c.l.b16 %v356
        %v551 = vunpack.c.l.b16 %v357
        %v552 = vunpack.c.l.b16 %v358
        %v553 = vunpack.c.l.b16 %v359
        %v554 = vunpack.c.l.b16 %v360
        %v555 = vunpack.c.l.b16 %v361
        %v556 = vunpack.c.l.b16 %v362
        %v557 = vunpack.c.l.b16 %v363
        %v558 = vunpack.c.l.b16 %v364
        %v559 = vunpack.c.l.b16 %v365
        %v560 = vunpack.c.l.b16 %v366
        %v561 = vunpack.c.l.b16 %v367
        %v562 = vunpack.c.l.b16 %v368
        %v563 = vunpack.c.l.b16 %v369
        %v564 = vunpack.c.l.b16 %v370
        %v565 = vunpack.c.l.b16 %v371
        %v566 = vunpack.c.l.b16 %v372
        %v567 = vpack.c.b16 %v472, %v471
        %v568 = vpack.c.b16 %v474, %v473
        %v569 = vpack.c.b16 %v476, %v475
        %v570 = vpack.c.b16 %v478, %v477
        %v571 = vpack.c.b16 %v480, %v479
        %v572 = vpack.c.b16 %v482, %v481
        %v573 = vpack.c.b16 %v484, %v483
        %v574 = vpack.c.b16 %v486, %v485
        %v575 = vpack.c.b16 %v488, %v487
        %v576 = vpack.c.b16 %v490, %v489
        %v577 = vpack.c.b16 %v492, %v491
        %v578 = vpack.c.b16 %v494, %v493
        %v579 = vpack.c.b16 %v496, %v495
        %v580 = vpack.c.b16 %v498, %v497
        %v581 = vpack.c.b16 %v500, %v499
        %v582 = vpack.c.b16 %v502, %v501
        %v583 = vpack.c.b16 %v504, %v503
        %v584 = vpack.c.b16 %v506, %v505
        %v585 = vpack.c.b16 %v508, %v507
        %v586 = vpack.c.b16 %v510, %v509
        %v587 = vpack.c.b16 %v512, %v511
        %v588 = vpack.c.b16 %v514, %v513
        %v589 = vpack.c.b16 %v516, %v515
        %v590 = vpack.c.b16 %v518, %v517
        %v591 = vpack.c.b16 %v520, %v519
        %v592 = vpack.c.b16 %v522, %v521
        %v593 = vpack.c.b16 %v524, %v523
        %v594 = vpack.c.b16 %v526, %v525
        %v595 = vpack.c.b16 %v528, %v527
        %v596 = vpack.c.b16 %v530, %v529
        %v597 = vpack.c.b16 %v532, %v531
        %v598 = vpack.c.b16 %v534, %v533
        %v599 = vpack.c.b16 %v536, %v535
        %v600 = vpack.c.b16 %v538, %v537
        %v601 = vpack.c.b16 %v540, %v539
        %v602 = vpack.c.b16 %v542, %v541
        %v603 = vpack.c.b16 %v544, %v543
        %v604 = vpack.c.b16 %v546, %v545
        %v605 = vpack.c.b16 %v548, %v547
        %v606 = vpack.c.b16 %v550, %v549
        %v607 = vpack.c.b16 %v552, %v551
        %v608 = vpack.c.b16 %v554, %v553
        %v609 = vpack.c.b16 %v556, %v555
        %v610 = vpack.c.b16 %v558, %v557
        %v611 = vpack.c.b16 %v560, %v559
        %v612 = vpack.c.b16 %v562, %v561
        %v613 = vpack.c.b16 %v564, %v563
        %v614 = vpack.c.b16 %v566, %v565
        %663 = vmatpush.bf16.msra.mxu0 %v574
        %664 = vmatpush.bf16.msra.mxu0 %v573
        %665 = vmatpush.bf16.msra.mxu0 %v572
        %666 = vmatpush.bf16.msra.mxu0 %v571
        %667 = vmatpush.bf16.msra.mxu0 %v570
        %668 = vmatpush.bf16.msra.mxu0 %v569
        %669 = vmatpush.bf16.msra.mxu0 %v568
        %670 = vmatpush.bf16.msra.mxu0 %v567
        %671 = vmatmul.bf16.gmra.mxu0 %v271
        %v672 = vpop.f32.mrf.mxu0
        %v673 = vadd.f32 %v374, %v672
        %v674 = vpop.f32.mrf.mxu0
        %v675 = vadd.f32 %v374, %v674
        %676 = vdwg.mxu0
        %677 = vmatpush.bf16.msra.mxu0 %v582
        %678 = vmatpush.bf16.msra.mxu0 %v581
        %679 = vmatpush.bf16.msra.mxu0 %v580
        %680 = vmatpush.bf16.msra.mxu0 %v579
        %681 = vmatpush.bf16.msra.mxu0 %v578
        %682 = vmatpush.bf16.msra.mxu0 %v577
        %683 = vmatpush.bf16.msra.mxu0 %v576
        %684 = vmatpush.bf16.msra.mxu0 %v575
        %685 = vmatmul.bf16.gmra.mxu0 %v272
        %v686 = vpop.f32.mrf.mxu0
        %v687 = vadd.f32 %v673, %v686
        %v688 = vpop.f32.mrf.mxu0
        %v689 = vadd.f32 %v675, %v688
        %690 = vdwg.mxu0
        %691 = vmatpush.bf16.msra.mxu0 %v590
        %692 = vmatpush.bf16.msra.mxu0 %v589
        %693 = vmatpush.bf16.msra.mxu0 %v588
        %694 = vmatpush.bf16.msra.mxu0 %v587
        %695 = vmatpush.bf16.msra.mxu0 %v586
        %696 = vmatpush.bf16.msra.mxu0 %v585
        %697 = vmatpush.bf16.msra.mxu0 %v584
        %698 = vmatpush.bf16.msra.mxu0 %v583
        %699 = vmatmul.bf16.gmra.mxu0 %v273
        %v700 = vpop.f32.mrf.mxu0
        %v701 = vadd.f32 %v687, %v700
        %v702 = vpop.f32.mrf.mxu0
        %v703 = vadd.f32 %v689, %v702
        %704 = vdwg.mxu0
        %705 = vmatpush.bf16.msra.mxu0 %v598
        %706 = vmatpush.bf16.msra.mxu0 %v597
        %707 = vmatpush.bf16.msra.mxu0 %v596
        %708 = vmatpush.bf16.msra.mxu0 %v595
        %709 = vmatpush.bf16.msra.mxu0 %v594
        %710 = vmatpush.bf16.msra.mxu0 %v593
        %711 = vmatpush.bf16.msra.mxu0 %v592
        %712 = vmatpush.bf16.msra.mxu0 %v591
        %713 = vmatmul.bf16.gmra.mxu0 %v274
        %v714 = vpop.f32.mrf.mxu0
        %v715 = vadd.f32 %v701, %v714
        %v716 = vpop.f32.mrf.mxu0
        %v717 = vadd.f32 %v703, %v716
        %718 = vdwg.mxu0
        %719 = vmatpush.bf16.msra.mxu0 %v606
        %720 = vmatpush.bf16.msra.mxu0 %v605
        %721 = vmatpush.bf16.msra.mxu0 %v604
        %722 = vmatpush.bf16.msra.mxu0 %v603
        %723 = vmatpush.bf16.msra.mxu0 %v602
        %724 = vmatpush.bf16.msra.mxu0 %v601
        %725 = vmatpush.bf16.msra.mxu0 %v600
        %726 = vmatpush.bf16.msra.mxu0 %v599
        %727 = vmatmul.bf16.gmra.mxu0 %v275
        %v728 = vpop.f32.mrf.mxu0
        %v729 = vadd.f32 %v715, %v728
        %v730 = vpop.f32.mrf.mxu0
        %v731 = vadd.f32 %v717, %v730
        %732 = vdwg.mxu0
        %733 = vmatpush.bf16.msra.mxu0 %v614
        %734 = vmatpush.bf16.msra.mxu0 %v613
        %735 = vmatpush.bf16.msra.mxu0 %v612
        %736 = vmatpush.bf16.msra.mxu0 %v611
        %737 = vmatpush.bf16.msra.mxu0 %v610
        %738 = vmatpush.bf16.msra.mxu0 %v609
        %739 = vmatpush.bf16.msra.mxu0 %v608
        %740 = vmatpush.bf16.msra.mxu0 %v607
        %741 = vmatmul.bf16.gmra.mxu0 %v276
        %v742 = vpop.f32.mrf.mxu0
        %v743 = vadd.f32 %v729, %v742
        %v744 = vpop.f32.mrf.mxu0
        %v745 = vadd.f32 %v731, %v744
        %746 = vdwg.mxu0
        %vm747 = vcmask 523264
        %v748 = vsel %vm747, %v743, 0.0
        %749 = vadd.xlane.f32.xlu0 %v748
        %v750 = vpop.xlane.xlu0 %749
        %v751 = vsel %vm747, %v745, 0.0
        %752 = vadd.xlane.f32.xlu0 %v751
        %v753 = vpop.xlane.xlu0 %752
        %v754 = vrcp.pop 64.0
        %v755 = vmul.f32 64.0, %v754
        %v756 = vsub.f32 1.0, %v755
        %v757 = vmul.f32 %v754, %v756
        %v758 = vadd.f32 %v754, %v757
        %vm759 = vweird.f32 %v754
        %v760 = vsel %vm759, %v754, %v758
        %v761 = vmul.f32 %v750, %v760
        %v762 = vmul.f32 %v753, %v760
        %v763 = vsub.f32 %v743, %v761
        %v764 = vsub.f32 %v745, %v762
        %v765 = vmul.f32 %v763, %v763
        %v766 = vmul.f32 %v764, %v764
        %v767 = vsel %vm747, %v765, 0.0
        %768 = vadd.xlane.f32.xlu0 %v767
        %v769 = vpop.xlane.xlu0 %768
        %v770 = vsel %vm747, %v766, 0.0
        %771 = vadd.xlane.f32.xlu0 %v770
        %v772 = vpop.xlane.xlu0 %771
        %v773 = vmul.f32 %v769, %v760
        %v774 = vmul.f32 %v772, %v760
        %v775 = vadd.f32 %v773, 1e-05
        %v776 = vadd.f32 %v774, 1e-05
        %v777 = vrsqrt.pop %v775
        %v778 = vmul.f32 %v777, %v775
        %v779 = vmul.f32 %v778, %v777
        %v780 = vmul.f32 0.5, %v779
        %v781 = vsub.f32 1.5, %v780
        %v782 = vmul.f32 %v777, %v781
        %vm783 = vweird.f32 %v775
        %vm784 = vweird.f32 %v777
        %vm785 = vmor %vm783, %vm784
        %v786 = vsel %vm785, %v777, %v782
        %v787 = vrsqrt.pop %v776
        %v788 = vmul.f32 %v787, %v776
        %v789 = vmul.f32 %v788, %v787
        %v790 = vmul.f32 0.5, %v789
        %v791 = vsub.f32 1.5, %v790
        %v792 = vmul.f32 %v787, %v791
        %vm793 = vweird.f32 %v776
        %vm794 = vweird.f32 %v787
        %vm795 = vmor %vm793, %vm794
        %v796 = vsel %vm795, %v787, %v792
        %v797 = vmul.f32 %v763, %v786
        %v798 = vmul.f32 %v764, %v796
        %v799 = vperm.slane %v373, 1
        %v800 = vmul.f32 %v797, %v799
        %v801 = vmul.f32 %v798, %v799
        %v802 = vperm.slane %v373, 2
        %v803 = vadd.f32 %v800, %v802
        %v804 = vadd.f32 %v801, %v802
        %v805 = vtanh.pop %v803
        %v806 = vtanh.pop %v804
        %v807 = vpack.c.bf16 %v806, %v805
        %v808 = vld [vmem:[%s3] sm:$0xf]
        %v809 = vld [vmem:[%s3 + $0x4] sm:$0xf]
        %v810 = vld [vmem:[%s3 + $0x8] sm:$0xf]
        %v811 = vld [vmem:[%s3 + $0xc] sm:$0xf]
        %v812 = vld [vmem:[%s3 + $0x10] sm:$0xf]
        %v813 = vld [vmem:[%s3 + $0x14] sm:$0xf]
        %v814 = vld [vmem:[%s3 + $0x18] sm:$0xf]
        %v815 = vld [vmem:[%s3 + $0x1c] sm:$0xf]
        %v816 = vld [vmem:[%s4] sm:$0x1]
        %v818 = vperm.slane %v816, 0
        %v828 = vunpack.c.l.b16 %v808
        %v829 = vunpack.c.l.b16 %v809
        %v830 = vunpack.c.l.b16 %v810
        %v831 = vunpack.c.l.b16 %v811
        %v832 = vunpack.c.l.b16 %v812
        %v833 = vunpack.c.l.b16 %v813
        %v834 = vunpack.c.l.b16 %v814
        %v835 = vunpack.c.l.b16 %v815
        %v836 = vpack.c.b16 %v829, %v828
        %v837 = vpack.c.b16 %v831, %v830
        %v838 = vpack.c.b16 %v833, %v832
        %v839 = vpack.c.b16 %v835, %v834
        %v845 = vsel %vm747, %v807, 0
        %847 = vmatpush.bf16.msra.mxu0 0
        %848 = vmatpush.bf16.msra.mxu0 0
        %849 = vmatpush.bf16.msra.mxu0 0
        %850 = vmatpush.bf16.msra.mxu0 0
        %851 = vmatpush.bf16.msra.mxu0 %v839
        %852 = vmatpush.bf16.msra.mxu0 %v838
        %853 = vmatpush.bf16.msra.mxu0 %v837
        %854 = vmatpush.bf16.msra.mxu0 %v836
        %855 = vmatmul.bf16.gmra.mxu0 %v845
        %v856 = vpop.f32.mrf.mxu0
        %v857 = vadd.f32 %v818, %v856
        %v858 = vpop.f32.mrf.mxu0
        %v859 = vadd.f32 %v818, %v858
        %860 = vdwg.mxu0
        %v861 = vpack.c.bf16 %v857, %v857
        %v862 = vpack.c.bf16 %v859, %v859
        %863 = vst [vmem:[%s235] sm:$0xf] %v861
        %864 = vst [vmem:[%s235 + $0x4] sm:$0xf] %v862
        %s865 = sand.u32 %s137, 1
        %s866 = scalar_lea.sflag [#allocation3], %s865
        %s867 = sand.u32 %s137, 1
        %s868 = smul.addr %s867, 8
        %s869 = scalar_lea.vmem [#allocation2], %s868
        // Predicated region
        $region41: #{tpu_custom_call.1} parent=39 // pred_check
          %p870 = pneg %p147
        $region42: #{tpu_custom_call.1} parent=39 // pred_check_branch
          %872 = sbr.rel (%p870) target = $region44
        $region43: #{tpu_custom_call.1} parent=39 // pred_region
          %s873 = smul.u32 2, %s19
          %s874 = ssub.s32 5, %s873
          %p875 = scmp.lt.s32.totalorder %s874, 2
          %s876 = scalar_select %p875, %s874, 2
          %s877 = smul.u32 4, %s876
          %s878 = ssub.s32 8, %s877
          %s879 = sshll.u32 %s878, 4
          %880 = vsyncadd %s866, %s879
          %p881 = scmp.ne.s32.totalorder 0, %s877
          %s882 = smul.addr %s873, 4
          %s883 = scalar_lea.hbm %s5, %s882
          %s884 = smul.u32 4, %s876
          %s885 = sshll.u32 %s869, 4
          %s886 = int_to_ptr.vmem [resolvable:$true] %s885
          %s887 = sshll.u32 %s883, 4
          %s888 = int_to_ptr.hbm [resolvable:$true] %s887
          %s889 = sshll.u32 %s884, 4
          %893 = dma.vmem_to_hbm [thread:$0]  (%p881), %s886, %s889, %s888, %s866, 64, 64, 4
        $region44: #{tpu_custom_call.1} parent=39 // pred_fallthru
          _
      $region40: #{tpu_custom_call.1} parent=5 // pred_fallthru
        _
      %p894 = scmp.le.s32.totalorder 2, %s14
      // Predicated region
      $region45: #{tpu_custom_call.1} parent=5 // pred_check
        %p895 = pneg %p894
      $region46: #{tpu_custom_call.1} parent=5 // pred_check_branch
        %897 = sbr.rel (%p895) target = $region48
      $region47: #{tpu_custom_call.1} parent=5 // pred_region
        %s898 = ssub.s32 %s14, 2
        // Predicated region
        $region49: #{tpu_custom_call.1} parent=47 // pred_check
          %p899 = pneg %p153
        $region50: #{tpu_custom_call.1} parent=47 // pred_check_branch
          %901 = sbr.rel (%p899) target = $region52
        $region51: #{tpu_custom_call.1} parent=47 // pred_region
          %s902 = sand.u32 %s138, 1
          %s903 = scalar_lea.sflag [#allocation3], %s902
          %s904 = sand.u32 %s138, 1
          %s905 = smul.addr %s904, 8
          %s906 = scalar_lea.vmem [#allocation2], %s905
          %908 = dma.done %s903, 128
        $region52: #{tpu_custom_call.1} parent=47 // pred_fallthru
          _
      $region48: #{tpu_custom_call.1} parent=5 // pred_fallthru
        _
    $region6: #{tpu_custom_call.1} parent=1 // loop_footer
      %s18 = sadd.s32 1, %s14
    $region7: #{tpu_custom_call.1} parent=1 // loop_footer_branch
      %13 = sbr.rel target = $region3
    $region8: #{tpu_custom_call.1} parent=1 // loop_exit
      _
    %909 = vsyncpa [#allocation3], 1
    %s910 = scalar_lea.sflag [#allocation3], 1
    %911 = vsyncpa %s910, 1

</llo_original>
